<compile_context>
chip_gen: v7x
topology: tpu7x:2x2x1
jax: 0.10.0
libtpu: 0.0.40
codegen_flags: <defaults>
</compile_context>

<pallas_src>
import jax
import jax.numpy as jnp
from jax.experimental import pallas as pl
from jax.experimental.pallas import tpu as pltpu

LANE = 128
SUBLANE = 8
_TARGET_BLOCK_BYTES = 2 * 1024 * 1024   # ~2 MiB per block
_COL_CANDIDATES = (8192, 4096, 2048, 1024, 512, 256, 128)


def _identity_kernel(x_ref, o_ref):
    # Elementwise hot path: straight VMEM copy (identity activation).
    o_ref[...] = x_ref[...]


def _round_up(v, m):
    return ((v + m - 1) // m) * m


def bound_activation_forward(x, *, block_bytes=_TARGET_BLOCK_BYTES):
    """Identity forward of BoundActivation.

    Large, 128-aligned inputs are streamed through a tiled Pallas copy kernel;
    everything else takes the exact fast path (return x), which is always
    correct because forward() is the identity.
    """
    n = x.size
    # Fast path: a kernel launch is never *required* for the identity; skip it
    # for inputs below one native (8,128) tile or with awkward element counts
    # (avoids padding + extra HBM passes entirely).
    if n < SUBLANE * LANE or (n % LANE) != 0:
        return x

    # Lane-dense 2-D view (metadata-only reshape: no pad, no trailing slice).
    # Pick the widest 128-multiple divisor so output stores are wide unmasked
    # `vst` and per-row DMA descriptors are few.
    cols = LANE
    for cand in _COL_CANDIDATES:
        if n % cand == 0 and n // cand >= 1:
            cols = cand
            break
    rows = n // cols
    x2d = x.reshape(rows, cols)

    itemsize = jnp.dtype(x.dtype).itemsize
    # Sublane packing granularity: 8 rows for 32-bit, 16 for bf16, 32 for int8.
    row_align = max(SUBLANE, SUBLANE * (4 // max(itemsize, 1)))
    block_rows = max(block_bytes // (cols * itemsize), row_align)
    block_rows = _round_up(block_rows, row_align)
    if block_rows >= rows:
        block_rows = rows            # single full-extent block (always legal)
    grid = (pl.cdiv(rows, block_rows),)   # ragged tail handled by masking

    out2d = pl.pallas_call(
        _identity_kernel,
        out_shape=jax.ShapeDtypeStruct((rows, cols), x.dtype),
        grid_spec=pltpu.PrefetchScalarGridSpec(
            num_scalar_prefetch=0,
            grid=grid,
            in_specs=[pl.BlockSpec((block_rows, cols), lambda i: (i, 0))],
            out_specs=pl.BlockSpec((block_rows, cols), lambda i: (i, 0)),
        ),
        # Identity: let the output reuse the input buffer (no second HBM
        # allocation when the caller donates x at the jit boundary).
        input_output_aliases={0: 0},
        compiler_params=pltpu.CompilerParams(
            dimension_semantics=("parallel",),
        ),
    )(x2d)

    return out2d.reshape(x.shape)


# TODO(synk): interval_propagate / linear_propagate / bound_backward depend on
# get_bound_lines(), which is abstract (returns None) in this base class, so
# only forward() is implemented as a kernel.


if __name__ == "__main__":
    key = jax.random.PRNGKey(0)

    # NCHW input consistent with the module: batch=2, channels=4, spatial 16x16.
    x = jax.random.normal(key, (2, 4, 16, 16), dtype=jnp.float32)
    y = jax.block_until_ready(bound_activation_forward(x))
    assert y.shape == x.shape and y.dtype == x.dtype
    assert bool(jnp.all(y == x))            # identity forward, exact match

    # Multi-step grid with a ragged last block (exercises the cdiv masking).
    x2 = jax.random.normal(key, (1023, 128), dtype=jnp.float32)
    y2 = jax.block_until_ready(
        bound_activation_forward(x2, block_bytes=64 * 1024))
    assert bool(jnp.all(y2 == x2))

    # bf16 input (exercises the 16-row sublane-packing alignment).
    x3 = jax.random.normal(key, (4, 8, 32, 32), dtype=jnp.bfloat16)
    y3 = jax.block_until_ready(bound_activation_forward(x3))
    assert y3.dtype == x3.dtype and bool(jnp.all(y3 == x3))

    # Fast path: element count not a multiple of 128 -> returned as-is.
    x4 = jax.random.normal(key, (3, 5, 7), dtype=jnp.float32)
    y4 = bound_activation_forward(x4)
    assert bool(jnp.all(y4 == x4))

    print("KERNEL_OK")
</pallas_src>

<mosaic_0001>
module attributes {stable_mosaic.version = 11 : i64} {
  func.func @_identity_kernel(%arg0: i32, %arg1: memref<1x2048xf32, #tpu.memory_space<vmem>>, %arg2: memref<1x2048xf32, #tpu.memory_space<vmem>>) attributes {dimension_semantics = [#tpu.dimension_semantics<parallel>], iteration_bounds = array<i64: 1>, scalar_prefetch = 0 : i64, scratch_operands = 0 : i64, tpu.core_type = #tpu.core_type<tc>, window_params = [{transform_indices = @transform_0, window_bounds = array<i64: 1, 2048>}, {transform_indices = @transform_1, window_bounds = array<i64: 1, 2048>}]} {
    %c0 = arith.constant 0 : index
    %c0_0 = arith.constant 0 : index
    %0 = vector.load %arg1[%c0, %c0_0] : memref<1x2048xf32, #tpu.memory_space<vmem>>, vector<1x2048xf32>
    %c0_1 = arith.constant 0 : index
    %c0_2 = arith.constant 0 : index
    %1 = vector.load %arg2[%c0_1, %c0_2] : memref<1x2048xf32, #tpu.memory_space<vmem>>, vector<1x2048xf32>
    tpu.vector_store %arg2[%c0_1, %c0_2], %0 {strides = array<i32>} : memref<1x2048xf32, #tpu.memory_space<vmem>>, vector<1x2048xf32>,
    return
  }
  func.func @transform_0(%arg0: i32) -> (i32, i32) {
    %c0_i32 = arith.constant 0 : i32
    %c0_i32_0 = arith.constant 0 : i32
    return %arg0, %c0_i32 : i32, i32
  }
  func.func @transform_1(%arg0: i32) -> (i32, i32) {
    %c0_i32 = arith.constant 0 : i32
    %c0_i32_0 = arith.constant 0 : i32
    return %arg0, %c0_i32 : i32, i32
  }
}

</mosaic_0001>

<llo_original>
// kernel: tpu_custom_call.1
$region0: #{tpu_custom_call.1}
  #allocation0 [shape = 'u32[]', space=smem, size = 0x4, offset = 0x4, fixed_abs, tag = 'smem constant byte address 0x4 - core index']
  #allocation1 [shape = 'u32[144,128]{1,0:T(1,128)}', space=vmem, size = 0x12000, scoped, tag = 'internal scratch']
  %s0 = inlined_call_operand.hbm [shape: f32[1,2048], index: 0, kind: input, shape index: {}, may-alias: {0,1}]
  %s1 = inlined_call_operand.hbm [shape: f32[1,2048], index: 1, kind: output, shape index: {}, may-alias: {0,1}]
  %s2 = sld [smem:[#allocation0]]
  $region18: #{tpu_custom_call.1} parent=0
    _
  %s4 = ssub.s32 1, %s2
  %s5 = scalar_select 0, %s4, %s2
  $region1: #{tpu_custom_call.1} parent=0
    #allocation2 [shape = 'u8[8192]{0}', space=vmem, size = 0x2000, scoped, tag = 'input window, operand 0, single buffered']
    #allocation3 [shape = 's32[1]{0}', space=sflag, size = 0x4, scoped, tag = 'scoped memory for tpu_custom_call.1']
    #allocation4 [shape = 's32[1]{0}', space=sflag, size = 0x4, scoped, tag = 'scoped memory for tpu_custom_call.1']
    #allocation5 [shape = 'u8[8192]{0}', space=vmem, size = 0x2000, scoped, tag = 'output window, operand 0, single buffered']
    %6 = vsyncpa [#allocation3], 0
    %7 = vsyncpa [#allocation4], 0
    // Predicated region
    $region2: #{tpu_custom_call.1} parent=1 // pred_check
      _
    $region3: #{tpu_custom_call.1} parent=1 // pred_check_branch
      %9 = sbr.rel (0) target = $region5
    $region4: #{tpu_custom_call.1} parent=1 // pred_region
      %s11 = ssub.s32 256, 256
      %12 = vsyncadd [#allocation3], %s11
      %s14 = sshll.u32 [#allocation2], 4
      %s15 = int_to_ptr.vmem [resolvable:$true] %s14
      %17 = dma.hbm_to_vmem [thread:$0]  %s0, 256, %s15, [#allocation3]
    $region5: #{tpu_custom_call.1} parent=1 // pred_fallthru
      _
    // Predicated region
    $region6: #{tpu_custom_call.1} parent=1 // pred_check
      _
    $region7: #{tpu_custom_call.1} parent=1 // pred_check_branch
      %19 = sbr.rel (0) target = $region9
    $region8: #{tpu_custom_call.1} parent=1 // pred_region
      %20 = dma.done [#allocation3], 256
    $region9: #{tpu_custom_call.1} parent=1 // pred_fallthru
      _
    %v21 = vld [vmem:[#allocation2] sm:$0xff]
    %v22 = vld [vmem:[#allocation2 + $0x8] sm:$0xff]
    %23 = vst [vmem:[#allocation5] sm:$0xff] %v21
    %24 = vst [vmem:[#allocation5 + $0x8] sm:$0xff] %v22
    // Predicated region
    $region10: #{tpu_custom_call.1} parent=1 // pred_check
      _
    $region11: #{tpu_custom_call.1} parent=1 // pred_check_branch
      %26 = sbr.rel (0) target = $region13
    $region12: #{tpu_custom_call.1} parent=1 // pred_region
      %s28 = ssub.s32 256, 256
      %29 = vsyncadd [#allocation4], %s28
      %s31 = sshll.u32 [#allocation5], 4
      %s32 = int_to_ptr.vmem [resolvable:$true] %s31
      %34 = dma.vmem_to_hbm [thread:$0]  %s32, 256, %s1, [#allocation4]
    $region13: #{tpu_custom_call.1} parent=1 // pred_fallthru
      _
    // Predicated region
    $region14: #{tpu_custom_call.1} parent=1 // pred_check
      _
    $region15: #{tpu_custom_call.1} parent=1 // pred_check_branch
      %36 = sbr.rel (0) target = $region17
    $region16: #{tpu_custom_call.1} parent=1 // pred_region
      %37 = dma.done [#allocation4], 256
    $region17: #{tpu_custom_call.1} parent=1 // pred_fallthru
      _
    %38 = vsyncpa [#allocation3], 1
    %39 = vsyncpa [#allocation4], 1

</llo_original>
